<compile_context>
chip_gen: v5e
topology: v5e:2x2
jax: 0.10.0
libtpu: 0.0.40
codegen_flags: <defaults>
</compile_context>

<pallas_src>
import jax
import jax.numpy as jnp
from jax.experimental import pallas as pl
from jax.experimental.pallas import tpu as pltpu


_LANE = 128
_SUBLANE = 8

# Only batch shape-matching (layer, K/V) entries into one call below this total
# stacked size; beyond it the stacking copy dominates (kernel is HBM-bound).
_STACK_BYTES_LIMIT = 4 << 20

# Seq-tile sizing budget and explicit scoped-VMEM limit.  48 MiB leaves
# headroom on v7x (64 MiB physical per TC) and is well under v5e/v6e's
# 128 MiB physical while exceeding their 16/32 MiB scoped defaults.
_VMEM_TILE_BUDGET = 40 << 20
_VMEM_LIMIT_CAP = 48 << 20


def _round_up(x: int, m: int) -> int:
    return ((x + m - 1) // m) * m


def _per_row_bytes(H, Dh, out_H, out_Dh, N, x_itemsize) -> int:
    """VMEM bytes per seq row: 2x-buffered x tile + 2x-buffered out tile (both
    lane-padded to 128) + the f32 (ts, N) accumulator the compiler keeps live."""
    return (2 * H * _round_up(Dh, _LANE) * x_itemsize
            + 2 * out_H * _round_up(out_Dh, _LANE) * x_itemsize
            + _round_up(N, _LANE) * 4)


def _fixed_vmem_bytes(K, N, w_itemsize) -> int:
    """Resident weight + bias, counted double-buffered (BlockSpec pipeline
    allocates 2 buffers even though their block index is constant per call)."""
    return 2 * (_round_up(K, _SUBLANE) * _round_up(N, _LANE) * w_itemsize
                + _SUBLANE * _round_up(N, _LANE) * w_itemsize)


def _choose_seq_tile(S, H, Dh, out_H, out_Dh, K, N, x_itemsize, w_itemsize) -> int:
    """Largest seq tile whose true (padded) double-buffered footprint fits the budget."""
    per_row = _per_row_bytes(H, Dh, out_H, out_Dh, N, x_itemsize)
    avail = max(_VMEM_TILE_BUDGET - _fixed_vmem_bytes(K, N, w_itemsize), 1 << 20)
    max_rows = max(_SUBLANE, avail // per_row)
    if S <= max_rows:
        return S  # full extent is always a legal block dim
    return max(_SUBLANE, min((max_rows // _SUBLANE) * _SUBLANE, 8192))


def _vmem_limit_bytes(ts, H, Dh, out_H, out_Dh, K, N, x_itemsize, w_itemsize) -> int:
    footprint = (_fixed_vmem_bytes(K, N, w_itemsize)
                 + _round_up(ts, _SUBLANE)
                 * _per_row_bytes(H, Dh, out_H, out_Dh, N, x_itemsize))
    limit = max(32 << 20, footprint + (4 << 20))  # headroom for compiler scratch
    if footprint + (2 << 20) <= _VMEM_LIMIT_CAP:
        limit = min(limit, _VMEM_LIMIT_CAP)       # v7x-safe cap when possible
    return int(limit)


def _kv_linear_kernel(x_ref, w_ref, b_ref, o_ref):
    """One (cache-entry, batch, seq-tile) grid step.

    x_ref: (H, TS, Dh)           aux-cache tile in its original heads-major layout
    w_ref: (K=H*Dh, N)           pre-transposed nn.Linear weight (W.T)
    b_ref: (1, N)
    o_ref: (out_H, TS, out_Dh)   with N = out_H * out_Dh

    Computes   y[t, :] = sum_h x[h, t, :] @ W.T[h*Dh:(h+1)*Dh, :] + b
    (== Linear(cache.permute(0,2,1,3).reshape(B,S,H*Dh)) of the reference),
    writing it already split into output heads (output permute folded in).
    """
    num_in_heads, _, head_dim = x_ref.shape

    # H-folded contraction, f32 accumulate on the MXU.  Sublane-stripe slices
    # of the resident weight start at multiples of Dh (>= 8): no relayout.
    acc = jnp.dot(x_ref[0], w_ref[0:head_dim, :],
                  preferred_element_type=jnp.float32)
    for h in range(1, num_in_heads):
        acc = acc + jnp.dot(
            x_ref[h],
            w_ref[h * head_dim:(h + 1) * head_dim, :],
            preferred_element_type=jnp.float32,
        )
    acc = acc + b_ref[...].astype(jnp.float32)

    # Output-head split (the final permute(0,2,1,3) of the reference).
    # out_Dh < 128 implies masked stores + XLU lane shuffles; both sit in
    # slots with slack in this HBM-bound kernel.
    out_heads, _, out_dh = o_ref.shape
    for oh in range(out_heads):
        o_ref[oh] = acc[:, oh * out_dh:(oh + 1) * out_dh].astype(o_ref.dtype)


def fused_kv_linear(x_g: jax.Array, w_g: jax.Array, b_g: jax.Array,
                    out_heads: int, *, max_seq_tile: int | None = None) -> jax.Array:
    """x_g:[G,B,H,S,Dh], w_g:[G,K,N] (=W.T), b_g:[G,1,N] -> [G,B,out_H,S,N/out_H]."""
    G, B, H, S, Dh = x_g.shape
    _, K, N = w_g.shape
    assert K == H * Dh, (K, H, Dh)
    assert N % out_heads == 0, (N, out_heads)
    out_dh = N // out_heads

    x_isz = x_g.dtype.itemsize
    w_isz = w_g.dtype.itemsize

    ts = _choose_seq_tile(S, H, Dh, out_heads, out_dh, K, N, x_isz, w_isz)
    if max_seq_tile is not None and ts > max_seq_tile:
        ts = max(_SUBLANE, (max_seq_tile // _SUBLANE) * _SUBLANE)

    # v7x has 2 TensorCores: make sure the "parallel" grid has >= 2 steps
    # even for small prefill/decode shapes (no-op on v5e/v6e).
    if G * B * pl.cdiv(S, ts) < 2 and S >= 2 * _SUBLANE:
        ts = min(_round_up(pl.cdiv(S, 2), _SUBLANE), (S // _SUBLANE) * _SUBLANE)

    vmem_limit = _vmem_limit_bytes(ts, H, Dh, out_heads, out_dh, K, N, x_isz, w_isz)
    grid = (G, B, pl.cdiv(S, ts))

    return pl.pallas_call(
        _kv_linear_kernel,
        out_shape=jax.ShapeDtypeStruct((G, B, out_heads, S, out_dh), x_g.dtype),
        grid=grid,
        in_specs=[
            # Cache tile: full H and Dh, streamed over (entry, batch, seq-tile).
            pl.BlockSpec((None, None, H, ts, Dh),
                         lambda g, b, s: (g, b, 0, s, 0)),
            # Weight / bias: depend only on the entry axis -> stay VMEM-resident
            # while (b, s) iterate.
            # TODO(synk): pipeline_mode=pl.Buffered(1) would drop the duplicate
            # weight buffer; left at the default since acceptance is
            # compiler-version dependent (footprint is accounted for instead).
            pl.BlockSpec((None, K, N), lambda g, b, s: (g, 0, 0)),
            pl.BlockSpec((None, 1, N), lambda g, b, s: (g, 0, 0)),
        ],
        out_specs=pl.BlockSpec((None, None, out_heads, ts, out_dh),
                               lambda g, b, s: (g, b, 0, s, 0)),
        compiler_params=pltpu.CompilerParams(
            dimension_semantics=("parallel", "parallel", "parallel"),
            vmem_limit_bytes=vmem_limit),
    )(x_g, w_g, b_g)


class LinearAuxKVToBaseKVPallas:
    """JAX/Pallas equivalent of LinearAuxKVToBaseKV (deterministic synthetic params)."""

    def __init__(self, auxiliary_k_dims, auxiliary_v_dims, base_k_dims,
                 base_v_dims, base_k_num_heads, base_v_num_heads, key):
        self.base_k_num_heads = list(base_k_num_heads)
        self.base_v_num_heads = list(base_v_num_heads)

        def make_linear_params(k, in_dim, out_dim):
            kw, kb = jax.random.split(k)
            # mimic nn.Linear default init: U(-1/sqrt(in), 1/sqrt(in))
            bound = 1.0 / (in_dim ** 0.5)
            w = jax.random.uniform(kw, (out_dim, in_dim), jnp.float32, -bound, bound)
            b = jax.random.uniform(kb, (out_dim,), jnp.float32, -bound, bound)
            return w, b

        keys = jax.random.split(key, len(auxiliary_k_dims) + len(auxiliary_v_dims))
        self.key_transforms = [
            make_linear_params(keys[i], a, o)
            for i, (a, o) in enumerate(zip(auxiliary_k_dims, base_k_dims))
        ]
        off = len(auxiliary_k_dims)
        self.value_transforms = [
            make_linear_params(keys[off + i], a, o)
            for i, (a, o) in enumerate(zip(auxiliary_v_dims, base_v_dims))
        ]
        # One-time kernel-side weight prep (free: done once at init):
        #   W:[N,K] -> W.T:[K,N],  bias:[N] -> [1,N]
        self._key_prepped = [(w.T, b.reshape(1, -1)) for (w, b) in self.key_transforms]
        self._value_prepped = [(w.T, b.reshape(1, -1)) for (w, b) in self.value_transforms]

    def __call__(self, past_keys, past_values):
        # Collect every (layer, K/V) transform as one work item.
        entries = []
        for i, cache in enumerate(past_keys):
            wt, b2 = self._key_prepped[i]
            entries.append(("k", i, cache, wt, b2, self.base_k_num_heads[i]))
        for i, cache in enumerate(past_values):
            wt, b2 = self._value_prepped[i]
            entries.append(("v", i, cache, wt, b2, self.base_v_num_heads[i]))

        # Group entries with identical shapes so they can share one pallas_call.
        groups = {}
        for e in entries:
            _, _, cache, wt, _, out_h = e
            sig = (cache.shape, str(cache.dtype), wt.shape, out_h)
            groups.setdefault(sig, []).append(e)

        results = {}
        for members in groups.values():
            cache_bytes = members[0][2].size * members[0][2].dtype.itemsize
            if len(members) > 1 and cache_bytes * len(members) > _STACK_BYTES_LIMIT:
                # The kernel is HBM-bound: stacking large caches would itself
                # cost a full extra read+write of every cache in the group, so
                # run each entry as its own G=1 call (free leading-unit
                # reshape, no copy) once the group is non-trivially sized.
                subgroups = [[m] for m in members]
            else:
                subgroups = [members]
            for sub in subgroups:
                if len(sub) == 1:
                    x_g = sub[0][2][None]   # free leading-unit reshape, no stack copy
                    w_g = sub[0][3][None]
                    b_g = sub[0][4][None]
                else:
                    x_g = jnp.stack([m[2] for m in sub])
                    w_g = jnp.stack([m[3] for m in sub])
                    b_g = jnp.stack([m[4] for m in sub])
                out_g = fused_kv_linear(x_g, w_g, b_g, sub[0][5])
                for gi, m in enumerate(sub):
                    results[(m[0], m[1])] = out_g[gi]

        return [
            [results[("k", i)] for i in range(len(past_keys))],
            [results[("v", i)] for i in range(len(past_values))],
        ]


def _reference_transform(layer_cache, w, b, out_h):
    """Pure-JAX reference of the PyTorch forward for one (layer, cache)."""
    B, H, S, Dh = layer_cache.shape
    x = jnp.transpose(layer_cache, (0, 2, 1, 3)).reshape(B, S, H * Dh)
    y = x @ w.T + b
    N = w.shape[0]
    return jnp.transpose(y.reshape(B, S, out_h, N // out_h), (0, 2, 1, 3))


if __name__ == "__main__":
    # Small synthetic config: 2 transformer layers.
    num_layers = 2
    batch = 2
    seq = 8
    aux_heads = 2
    aux_head_dim = 16                     # aux dim = 32
    auxiliary_k_dims = [aux_heads * aux_head_dim] * num_layers
    auxiliary_v_dims = [aux_heads * aux_head_dim] * num_layers
    base_k_dims = [64] * num_layers
    base_v_dims = [64] * num_layers
    base_k_num_heads = [4] * num_layers
    base_v_num_heads = [4] * num_layers

    root = jax.random.PRNGKey(0)
    k_params, k_keys, k_vals, k_extra = jax.random.split(root, 4)

    model = LinearAuxKVToBaseKVPallas(
        auxiliary_k_dims, auxiliary_v_dims, base_k_dims, base_v_dims,
        base_k_num_heads, base_v_num_heads, key=k_params)

    key_subkeys = jax.random.split(k_keys, num_layers)
    val_subkeys = jax.random.split(k_vals, num_layers)
    past_keys = [
        jax.random.normal(key_subkeys[i], (batch, aux_heads, seq, aux_head_dim),
                          jnp.float32)
        for i in range(num_layers)
    ]
    past_values = [
        jax.random.normal(val_subkeys[i], (batch, aux_heads, seq, aux_head_dim),
                          jnp.float32)
        for i in range(num_layers)
    ]

    out = model(past_keys, past_values)
    out = jax.block_until_ready(out)

    # 1) f32 correctness vs a pure-JAX reference of the same math.
    for i in range(num_layers):
        ref_k = _reference_transform(past_keys[i], *model.key_transforms[i],
                                     base_k_num_heads[i])
        ref_v = _reference_transform(past_values[i], *model.value_transforms[i],
                                     base_v_num_heads[i])
        assert out[0][i].shape == (batch, base_k_num_heads[i], seq,
                                   base_k_dims[i] // base_k_num_heads[i])
        assert out[1][i].shape == (batch, base_v_num_heads[i], seq,
                                   base_v_dims[i] // base_v_num_heads[i])
        assert jnp.allclose(out[0][i], ref_k, atol=1e-5, rtol=1e-5)
        assert jnp.allclose(out[1][i], ref_v, atol=1e-5, rtol=1e-5)

    # 2) Partial-last-seq-tile guard: S not divisible by a forced small tile.
    wt0, b20 = model._key_prepped[0]
    w0, b0 = model.key_transforms[0]
    x_part = jax.random.normal(k_extra, (1, aux_heads, 20, aux_head_dim), jnp.float32)
    out_part = fused_kv_linear(x_part[None], wt0[None], b20[None],
                               base_k_num_heads[0], max_seq_tile=8)[0]
    out_part = jax.block_until_ready(out_part)
    ref_part = _reference_transform(x_part, w0, b0, base_k_num_heads[0])
    assert jnp.allclose(out_part, ref_part, atol=1e-5, rtol=1e-5)

    # 3) bf16 streaming path (halves HBM read+write traffic; f32 accumulate).
    x_bf16 = past_keys[0].astype(jnp.bfloat16)
    out_bf16 = fused_kv_linear(x_bf16[None], wt0.astype(jnp.bfloat16)[None],
                               b20.astype(jnp.bfloat16)[None],
                               base_k_num_heads[0])[0]
    out_bf16 = jax.block_until_ready(out_bf16)
    ref0 = _reference_transform(past_keys[0], w0, b0, base_k_num_heads[0])
    assert out_bf16.dtype == jnp.bfloat16
    assert jnp.allclose(out_bf16.astype(jnp.float32), ref0, atol=5e-2, rtol=5e-2)

    print("KERNEL_OK")
</pallas_src>

<mosaic_0001>
module attributes {stable_mosaic.version = 11 : i64} {
  func.func @_kv_linear_kernel(%arg0: i32, %arg1: i32, %arg2: i32, %arg3: memref<1x1x2x8x16xf32, #tpu.memory_space<vmem>>, %arg4: memref<1x32x64xf32, #tpu.memory_space<vmem>>, %arg5: memref<1x1x64xf32, #tpu.memory_space<vmem>>, %arg6: memref<1x1x4x8x16xf32, #tpu.memory_space<vmem>>) attributes {dimension_semantics = [#tpu.dimension_semantics<parallel>, #tpu.dimension_semantics<parallel>, #tpu.dimension_semantics<parallel>], iteration_bounds = array<i64: 4, 2, 1>, scalar_prefetch = 0 : i64, scratch_operands = 0 : i64, tpu.core_type = #tpu.core_type<tc>, window_params = [{transform_indices = @transform_0, window_bounds = array<i64: 1, 1, 2, 8, 16>}, {transform_indices = @transform_1, window_bounds = array<i64: 1, 32, 64>}, {transform_indices = @transform_2, window_bounds = array<i64: 1, 1, 64>}, {transform_indices = @transform_3, window_bounds = array<i64: 1, 1, 4, 8, 16>}]} {
    %c0 = arith.constant 0 : index
    %c0_0 = arith.constant 0 : index
    %c0_1 = arith.constant 0 : index
    %c0_2 = arith.constant 0 : index
    %c0_3 = arith.constant 0 : index
    %0 = vector.load %arg3[%c0, %c0_0, %c0_1, %c0_2, %c0_3] : memref<1x1x2x8x16xf32, #tpu.memory_space<vmem>>, vector<1x1x1x8x16xf32>
    %1 = vector.shape_cast %0 : vector<1x1x1x8x16xf32> to vector<8x16xf32>
    %c0_4 = arith.constant 0 : index
    %c0_5 = arith.constant 0 : index
    %c0_6 = arith.constant 0 : index
    %2 = vector.load %arg4[%c0_4, %c0_5, %c0_6] : memref<1x32x64xf32, #tpu.memory_space<vmem>>, vector<1x16x64xf32>
    %3 = vector.shape_cast %2 : vector<1x16x64xf32> to vector<16x64xf32>
    %cst = arith.constant dense<0.000000e+00> : vector<8x64xf32>
    %4 = tpu.matmul %1, %3, %cst {dimension_numbers = #tpu.dot_dimension_numbers<[1], [0], [0], [1], [0, 0, 1, 1], [], []>} : vector<8x16xf32>, vector<16x64xf32>, vector<8x64xf32> -> vector<8x64xf32>
    %c0_7 = arith.constant 0 : index
    %c0_8 = arith.constant 0 : index
    %c1 = arith.constant 1 : index
    %c0_9 = arith.constant 0 : index
    %c0_10 = arith.constant 0 : index
    %5 = vector.load %arg3[%c0_7, %c0_8, %c1, %c0_9, %c0_10] : memref<1x1x2x8x16xf32, #tpu.memory_space<vmem>>, vector<1x1x1x8x16xf32>
    %6 = vector.shape_cast %5 : vector<1x1x1x8x16xf32> to vector<8x16xf32>
    %c0_11 = arith.constant 0 : index
    %c16 = arith.constant 16 : index
    %c0_12 = arith.constant 0 : index
    %7 = vector.load %arg4[%c0_11, %c16, %c0_12] : memref<1x32x64xf32, #tpu.memory_space<vmem>>, vector<1x16x64xf32>
    %8 = vector.shape_cast %7 : vector<1x16x64xf32> to vector<16x64xf32>
    %cst_13 = arith.constant dense<0.000000e+00> : vector<8x64xf32>
    %9 = tpu.matmul %6, %8, %cst_13 {dimension_numbers = #tpu.dot_dimension_numbers<[1], [0], [0], [1], [0, 0, 1, 1], [], []>} : vector<8x16xf32>, vector<16x64xf32>, vector<8x64xf32> -> vector<8x64xf32>
    %10 = arith.addf %4, %9 : vector<8x64xf32>
    %c0_14 = arith.constant 0 : index
    %c0_15 = arith.constant 0 : index
    %c0_16 = arith.constant 0 : index
    %11 = vector.load %arg5[%c0_14, %c0_15, %c0_16] : memref<1x1x64xf32, #tpu.memory_space<vmem>>, vector<1x1x64xf32>
    %12 = vector.shape_cast %11 : vector<1x1x64xf32> to vector<1x64xf32>
    %13 = vector.broadcast %12 : vector<1x64xf32> to vector<8x64xf32>
    %14 = arith.addf %10, %13 : vector<8x64xf32>
    %15 = vector.extract_strided_slice %14 {offsets = [0, 0], sizes = [8, 16], strides = [1, 1]} : vector<8x64xf32> to vector<8x16xf32>
    %c0_17 = arith.constant 0 : index
    %c0_18 = arith.constant 0 : index
    %c0_19 = arith.constant 0 : index
    %c0_20 = arith.constant 0 : index
    %c0_21 = arith.constant 0 : index
    %16 = vector.load %arg6[%c0_17, %c0_18, %c0_19, %c0_20, %c0_21] : memref<1x1x4x8x16xf32, #tpu.memory_space<vmem>>, vector<1x1x1x8x16xf32>
    %17 = vector.shape_cast %16 : vector<1x1x1x8x16xf32> to vector<8x16xf32>
    %18 = vector.shape_cast %15 : vector<8x16xf32> to vector<1x1x1x8x16xf32>
    tpu.vector_store %arg6[%c0_17, %c0_18, %c0_19, %c0_20, %c0_21], %18 {strides = array<i32>} : memref<1x1x4x8x16xf32, #tpu.memory_space<vmem>>, vector<1x1x1x8x16xf32>,
    %19 = vector.extract_strided_slice %14 {offsets = [0, 16], sizes = [8, 16], strides = [1, 1]} : vector<8x64xf32> to vector<8x16xf32>
    %c0_22 = arith.constant 0 : index
    %c0_23 = arith.constant 0 : index
    %c1_24 = arith.constant 1 : index
    %c0_25 = arith.constant 0 : index
    %c0_26 = arith.constant 0 : index
    %20 = vector.load %arg6[%c0_22, %c0_23, %c1_24, %c0_25, %c0_26] : memref<1x1x4x8x16xf32, #tpu.memory_space<vmem>>, vector<1x1x1x8x16xf32>
    %21 = vector.shape_cast %20 : vector<1x1x1x8x16xf32> to vector<8x16xf32>
    %22 = vector.shape_cast %19 : vector<8x16xf32> to vector<1x1x1x8x16xf32>
    tpu.vector_store %arg6[%c0_22, %c0_23, %c1_24, %c0_25, %c0_26], %22 {strides = array<i32>} : memref<1x1x4x8x16xf32, #tpu.memory_space<vmem>>, vector<1x1x1x8x16xf32>,
    %23 = vector.extract_strided_slice %14 {offsets = [0, 32], sizes = [8, 16], strides = [1, 1]} : vector<8x64xf32> to vector<8x16xf32>
    %c0_27 = arith.constant 0 : index
    %c0_28 = arith.constant 0 : index
    %c2 = arith.constant 2 : index
    %c0_29 = arith.constant 0 : index
    %c0_30 = arith.constant 0 : index
    %24 = vector.load %arg6[%c0_27, %c0_28, %c2, %c0_29, %c0_30] : memref<1x1x4x8x16xf32, #tpu.memory_space<vmem>>, vector<1x1x1x8x16xf32>
    %25 = vector.shape_cast %24 : vector<1x1x1x8x16xf32> to vector<8x16xf32>
    %26 = vector.shape_cast %23 : vector<8x16xf32> to vector<1x1x1x8x16xf32>
    tpu.vector_store %arg6[%c0_27, %c0_28, %c2, %c0_29, %c0_30], %26 {strides = array<i32>} : memref<1x1x4x8x16xf32, #tpu.memory_space<vmem>>, vector<1x1x1x8x16xf32>,
    %27 = vector.extract_strided_slice %14 {offsets = [0, 48], sizes = [8, 16], strides = [1, 1]} : vector<8x64xf32> to vector<8x16xf32>
    %c0_31 = arith.constant 0 : index
    %c0_32 = arith.constant 0 : index
    %c3 = arith.constant 3 : index
    %c0_33 = arith.constant 0 : index
    %c0_34 = arith.constant 0 : index
    %28 = vector.load %arg6[%c0_31, %c0_32, %c3, %c0_33, %c0_34] : memref<1x1x4x8x16xf32, #tpu.memory_space<vmem>>, vector<1x1x1x8x16xf32>
    %29 = vector.shape_cast %28 : vector<1x1x1x8x16xf32> to vector<8x16xf32>
    %30 = vector.shape_cast %27 : vector<8x16xf32> to vector<1x1x1x8x16xf32>
    tpu.vector_store %arg6[%c0_31, %c0_32, %c3, %c0_33, %c0_34], %30 {strides = array<i32>} : memref<1x1x4x8x16xf32, #tpu.memory_space<vmem>>, vector<1x1x1x8x16xf32>,
    return
  }
  func.func @transform_0(%arg0: i32, %arg1: i32, %arg2: i32) -> (i32, i32, i32, i32, i32) {
    %c0_i32 = arith.constant 0 : i32
    %c0_i32_0 = arith.constant 0 : i32
    %c0_i32_1 = arith.constant 0 : i32
    return %arg0, %arg1, %c0_i32, %arg2, %c0_i32_0 : i32, i32, i32, i32, i32
  }
  func.func @transform_1(%arg0: i32, %arg1: i32, %arg2: i32) -> (i32, i32, i32) {
    %c0_i32 = arith.constant 0 : i32
    %c0_i32_0 = arith.constant 0 : i32
    %c0_i32_1 = arith.constant 0 : i32
    return %arg0, %c0_i32, %c0_i32_0 : i32, i32, i32
  }
  func.func @transform_2(%arg0: i32, %arg1: i32, %arg2: i32) -> (i32, i32, i32) {
    %c0_i32 = arith.constant 0 : i32
    %c0_i32_0 = arith.constant 0 : i32
    %c0_i32_1 = arith.constant 0 : i32
    return %arg0, %c0_i32, %c0_i32_0 : i32, i32, i32
  }
  func.func @transform_3(%arg0: i32, %arg1: i32, %arg2: i32) -> (i32, i32, i32, i32, i32) {
    %c0_i32 = arith.constant 0 : i32
    %c0_i32_0 = arith.constant 0 : i32
    %c0_i32_1 = arith.constant 0 : i32
    return %arg0, %arg1, %c0_i32, %arg2, %c0_i32_0 : i32, i32, i32, i32, i32
  }
}

</mosaic_0001>

<llo_original>
// kernel: tpu_custom_call.1
$region0: #{tpu_custom_call.1}
  #allocation0 [shape = 'u32[]', space=smem, size = 0x4, offset = 0x4, fixed_abs, tag = 'smem constant byte address 0x4 - core index']
  #allocation1 [shape = 'u32[72,128]{1,0:T(1,128)}', space=vmem, size = 0x9000, scoped, tag = 'internal scratch']
  %s0 = inlined_call_operand.hbm [shape: f32[4,2,2,8,16], index: 0, kind: input, shape index: {}]
  %s1 = inlined_call_operand.hbm [shape: f32[4,32,64], index: 1, kind: input, shape index: {}]
  %s2 = inlined_call_operand.hbm [shape: f32[4,1,64], index: 2, kind: input, shape index: {}]
  %s3 = inlined_call_operand.hbm [shape: f32[4,2,4,8,16], index: 3, kind: output, shape index: {}]
  %s4 = sld [smem:[#allocation0]]
  $region57: #{tpu_custom_call.1} parent=0
    _
  %s6 = ssub.s32 1, %s4
  %s7 = scalar_select 0, %s6, %s4
  $region1: #{tpu_custom_call.1} parent=0
    #allocation2 [shape = 'u8[16384]{0}', space=vmem, size = 0x4000, scoped, tag = 'input window, operand 0']
    #allocation3 [shape = 's32[2]{0}', space=sflag, size = 0x8, scoped, tag = 'scoped memory for tpu_custom_call.1']
    #allocation4 [shape = 's32[2]{0}', space=sflag, size = 0x8, scoped, tag = 'scoped memory for tpu_custom_call.1']
    #allocation5 [shape = 'u8[32768]{0}', space=vmem, size = 0x8000, scoped, tag = 'input window, operand 1']
    #allocation6 [shape = 's32[2]{0}', space=sflag, size = 0x8, scoped, tag = 'scoped memory for tpu_custom_call.1']
    #allocation7 [shape = 'u8[1024]{0}', space=vmem, size = 0x400, scoped, tag = 'input window, operand 2']
    #allocation8 [shape = 'u8[32768]{0}', space=vmem, size = 0x8000, scoped, tag = 'output window, operand 0']
    %8 = vsyncpa [#allocation3], 0
    %s9 = scalar_lea.sflag [#allocation3], 1
    %10 = vsyncpa %s9, 0
    %11 = vsyncpa [#allocation6], 0
    %s12 = scalar_lea.sflag [#allocation6], 1
    %13 = vsyncpa %s12, 0
    %14 = vsyncpa [#allocation4], 0
    %s15 = scalar_lea.sflag [#allocation4], 1
    %16 = vsyncpa %s15, 0
    loop: start=0, step=1, limit=10
    $region2: #{tpu_custom_call.1} parent=1 // loop_pre_header
      _
    $region3: #{tpu_custom_call.1} parent=1 // loop_header
      %s18 = sphi 0, %s22
      %p19 = scmp.ge.s32.totalorder %s18, 10
      %s25 = sphi 0, %s44
      %s26 = sphi 0, %s40
      %s27 = sphi 0, %s36
      %s28 = sphi 0, %s25
      %s29 = sphi 0, %s26
      %s30 = sphi 0, %s27
      %s31 = sphi 0, %s28
      %s32 = sphi 0, %s29
      %s33 = sphi 0, %s30
      %s51 = sphi 0, %s53
      %s54 = sphi 0, %s51
      %s55 = sphi 0, %s54
      %s71 = sphi 0, %s55
      %s77 = sphi 0, %s79
      %s80 = sphi 0, %s77
      %s81 = sphi 0, %s80
      %s97 = sphi 0, %s81
      %s103 = sphi 0, %s105
      %s106 = sphi 0, %s103
      %s107 = sphi 0, %s106
      %s123 = sphi 0, %s107
      %s133 = sphi 0, %s135
      %s136 = sphi 0, %s133
      %s137 = sphi 0, %s136
      %s153 = sphi 0, %s137
    $region4: #{tpu_custom_call.1} parent=1 // loop_header_branch
      %21 = sbr.rel (%p19) target = $region8
    $region5: #{tpu_custom_call.1} parent=1 // loop_body
      %s23 = ssub.s32 %s18, 1
      %s24 = ssub.s32 %s18, 2
      %s34 = sadd.s32 1, %s27
      %p35 = scmp.ge.s32.totalorder %s34, 1
      %s36 = scalar_select %p35, 0, %s34
      %s37 = sadd.s32 1, %s26
      %s38 = scalar_select %p35, %s37, %s26
      %p39 = scmp.ge.s32.totalorder %s38, 2
      %s40 = scalar_select %p39, 0, %s38
      %s41 = sadd.s32 1, %s25
      %s42 = scalar_select %p39, %s41, %s25
      %p43 = scmp.ge.s32.totalorder %s42, 4
      %s44 = scalar_select %p43, 0, %s42
      %s45 = ssub.s32 %s25, %s44
      %s46 = ssub.s32 %s26, %s40
      %s47 = sor.u32 %s45, %s46
      %s48 = ssub.s32 %s27, %s36
      %s49 = sor.u32 %s47, %s48
      %p50 = scmp.eq.s32.totalorder %s49, 0
      %s52 = sadd.s32 %s51, 1
      %s53 = scalar_select %p50, %s51, %s52
      %p56 = pneg %p50
      %p57 = scmp.eq.s32.totalorder %s18, 7
      %p58 = por %p56, %p57
      %p59 = scmp.ne.s32.totalorder %s51, %s54
      %p60 = scmp.eq.s32.totalorder %s18, 0
      %p61 = por %p59, %p60
      %p62 = scmp.ne.s32.totalorder %s51, %s54
      %p63 = scmp.eq.s32.totalorder %s23, 7
      %p64 = por %p62, %p63
      %p65 = scmp.ne.s32.totalorder %s54, %s55
      %p66 = scmp.eq.s32.totalorder %s23, 0
      %p67 = por %p65, %p66
      %p68 = scmp.ne.s32.totalorder %s54, %s55
      %p69 = scmp.eq.s32.totalorder %s24, 7
      %p70 = por %p68, %p69
      %p72 = scmp.ne.s32.totalorder %s55, %s71
      %p73 = scmp.eq.s32.totalorder %s24, 0
      %p74 = por %p72, %p73
      %s75 = ssub.s32 %s25, %s44
      %p76 = scmp.eq.s32.totalorder %s75, 0
      %s78 = sadd.s32 %s77, 1
      %s79 = scalar_select %p76, %s77, %s78
      %p82 = pneg %p76
      %p83 = scmp.eq.s32.totalorder %s18, 7
      %p84 = por %p82, %p83
      %p85 = scmp.ne.s32.totalorder %s77, %s80
      %p86 = scmp.eq.s32.totalorder %s18, 0
      %p87 = por %p85, %p86
      %p88 = scmp.ne.s32.totalorder %s77, %s80
      %p89 = scmp.eq.s32.totalorder %s23, 7
      %p90 = por %p88, %p89
      %p91 = scmp.ne.s32.totalorder %s80, %s81
      %p92 = scmp.eq.s32.totalorder %s23, 0
      %p93 = por %p91, %p92
      %p94 = scmp.ne.s32.totalorder %s80, %s81
      %p95 = scmp.eq.s32.totalorder %s24, 7
      %p96 = por %p94, %p95
      %p98 = scmp.ne.s32.totalorder %s81, %s97
      %p99 = scmp.eq.s32.totalorder %s24, 0
      %p100 = por %p98, %p99
      %s101 = ssub.s32 %s25, %s44
      %p102 = scmp.eq.s32.totalorder %s101, 0
      %s104 = sadd.s32 %s103, 1
      %s105 = scalar_select %p102, %s103, %s104
      %p108 = pneg %p102
      %p109 = scmp.eq.s32.totalorder %s18, 7
      %p110 = por %p108, %p109
      %p111 = scmp.ne.s32.totalorder %s103, %s106
      %p112 = scmp.eq.s32.totalorder %s18, 0
      %p113 = por %p111, %p112
      %p114 = scmp.ne.s32.totalorder %s103, %s106
      %p115 = scmp.eq.s32.totalorder %s23, 7
      %p116 = por %p114, %p115
      %p117 = scmp.ne.s32.totalorder %s106, %s107
      %p118 = scmp.eq.s32.totalorder %s23, 0
      %p119 = por %p117, %p118
      %p120 = scmp.ne.s32.totalorder %s106, %s107
      %p121 = scmp.eq.s32.totalorder %s24, 7
      %p122 = por %p120, %p121
      %p124 = scmp.ne.s32.totalorder %s107, %s123
      %p125 = scmp.eq.s32.totalorder %s24, 0
      %p126 = por %p124, %p125
      %s127 = ssub.s32 %s25, %s44
      %s128 = ssub.s32 %s26, %s40
      %s129 = sor.u32 %s127, %s128
      %s130 = ssub.s32 %s27, %s36
      %s131 = sor.u32 %s129, %s130
      %p132 = scmp.eq.s32.totalorder %s131, 0
      %s134 = sadd.s32 %s133, 1
      %s135 = scalar_select %p132, %s133, %s134
      %p138 = pneg %p132
      %p139 = scmp.eq.s32.totalorder %s18, 7
      %p140 = por %p138, %p139
      %p141 = scmp.ne.s32.totalorder %s133, %s136
      %p142 = scmp.eq.s32.totalorder %s18, 0
      %p143 = por %p141, %p142
      %p144 = scmp.ne.s32.totalorder %s133, %s136
      %p145 = scmp.eq.s32.totalorder %s23, 7
      %p146 = por %p144, %p145
      %p147 = scmp.ne.s32.totalorder %s136, %s137
      %p148 = scmp.eq.s32.totalorder %s23, 0
      %p149 = por %p147, %p148
      %p150 = scmp.ne.s32.totalorder %s136, %s137
      %p151 = scmp.eq.s32.totalorder %s24, 7
      %p152 = por %p150, %p151
      %p154 = scmp.ne.s32.totalorder %s137, %s153
      %p155 = scmp.eq.s32.totalorder %s24, 0
      %p156 = por %p154, %p155
      %p157 = scmp.le.s32.totalorder 1, %s18
      %p158 = scmp.lt.s32.totalorder %s18, 9
      %p159 = pnand %p157, %p158
      %p160 = pneg %p159
      // Predicated region
      $region9: #{tpu_custom_call.1} parent=5 // pred_check
        _
      $region10: #{tpu_custom_call.1} parent=5 // pred_check_branch
        %162 = sbr.rel (%p159) target = $region12
      $region11: #{tpu_custom_call.1} parent=5 // pred_region
        %s163 = ssub.s32 %s18, 1
      $region12: #{tpu_custom_call.1} parent=5 // pred_fallthru
        _
      %p164 = scmp.lt.s32.totalorder %s18, 8
      // Predicated region
      $region13: #{tpu_custom_call.1} parent=5 // pred_check
        %p165 = pneg %p164
      $region14: #{tpu_custom_call.1} parent=5 // pred_check_branch
        %167 = sbr.rel (%p165) target = $region16
      $region15: #{tpu_custom_call.1} parent=5 // pred_region
        // Predicated region
        $region17: #{tpu_custom_call.1} parent=15 // pred_check
          %p168 = pneg %p61
        $region18: #{tpu_custom_call.1} parent=15 // pred_check_branch
          %170 = sbr.rel (%p168) target = $region20
        $region19: #{tpu_custom_call.1} parent=15 // pred_region
          %s171 = sand.u32 %s51, 1
          %s172 = scalar_lea.sflag [#allocation3], %s171
          %s173 = sand.u32 %s51, 1
          %s174 = smul.addr %s173, 16
          %s175 = scalar_lea.vmem [#allocation2], %s174
          %177 = vsyncadd %s172, 0
          %s178 = smul.addr %s26, 2
          %s179 = sadd.s32 %s27, %s178
          %s180 = smul.addr %s25, 4
          %s181 = sadd.s32 %s179, %s180
          %s182 = smul.addr %s181, 8
          %s183 = scalar_lea.hbm %s0, %s182
          %s184 = sshll.u32 %s183, 4
          %s185 = int_to_ptr.hbm [resolvable:$true] %s184
          %s186 = sshll.u32 %s175, 4
          %s187 = int_to_ptr.vmem [resolvable:$true] %s186
          %192 = dma.hbm_to_vmem [thread:$0]  %s185, 256, %s187, %s172, 128, 128, 8
        $region20: #{tpu_custom_call.1} parent=15 // pred_fallthru
          _
        // Predicated region
        $region21: #{tpu_custom_call.1} parent=15 // pred_check
          %p193 = pneg %p87
        $region22: #{tpu_custom_call.1} parent=15 // pred_check_branch
          %195 = sbr.rel (%p193) target = $region24
        $region23: #{tpu_custom_call.1} parent=15 // pred_region
          %s196 = sand.u32 %s18, 1
          %s197 = scalar_lea.sflag [#allocation6], %s196
          %s198 = sand.u32 %s77, 1
          %s199 = smul.addr %s198, 32
          %s200 = scalar_lea.vmem [#allocation5], %s199
          %202 = vsyncadd %s197, 0
          %s203 = smul.addr %s25, 4
          %s204 = smul.addr %s203, 8
          %s205 = scalar_lea.hbm %s1, %s204
          %s206 = sshll.u32 %s205, 4
          %s207 = int_to_ptr.hbm [resolvable:$true] %s206
          %s208 = sshll.u32 %s200, 4
          %s209 = int_to_ptr.vmem [resolvable:$true] %s208
          %214 = dma.hbm_to_vmem [thread:$0]  %s207, 512, %s209, %s197, 128, 128, 8
        $region24: #{tpu_custom_call.1} parent=15 // pred_fallthru
          _
        // Predicated region
        $region25: #{tpu_custom_call.1} parent=15 // pred_check
          %p215 = pneg %p113
        $region26: #{tpu_custom_call.1} parent=15 // pred_check_branch
          %217 = sbr.rel (%p215) target = $region28
        $region27: #{tpu_custom_call.1} parent=15 // pred_region
          %s218 = sand.u32 %s18, 1
          %s219 = scalar_lea.sflag [#allocation6], %s218
          %s220 = sand.u32 %s103, 1
          %s221 = scalar_lea.vmem [#allocation7], %s220
          %223 = vsyncadd %s219, 0
          %s224 = scalar_lea.hbm %s2, %s25
          %s226 = sshll.u32 %s224, 4
          %s227 = int_to_ptr.hbm [resolvable:$true] %s226
          %s228 = sshll.u32 %s221, 4
          %s229 = int_to_ptr.vmem [resolvable:$true] %s228
          %231 = dma.hbm_to_vmem [thread:$0]  %s227, 16, %s229, %s219
        $region28: #{tpu_custom_call.1} parent=15 // pred_fallthru
          _
      $region16: #{tpu_custom_call.1} parent=5 // pred_fallthru
        _
      %p232 = scmp.le.s32.totalorder 1, %s18
      %p233 = scmp.lt.s32.totalorder %s18, 9
      %p234 = pnand %p232, %p233
      %p235 = pneg %p234
      // Predicated region
      $region29: #{tpu_custom_call.1} parent=5 // pred_check
        _
      $region30: #{tpu_custom_call.1} parent=5 // pred_check_branch
        %237 = sbr.rel (%p234) target = $region32
      $region31: #{tpu_custom_call.1} parent=5 // pred_region
        %s238 = ssub.s32 %s18, 1
        %s239 = sand.u32 %s54, 1
        %s240 = scalar_lea.sflag [#allocation3], %s239
        %s241 = sand.u32 %s54, 1
        %s242 = smul.addr %s241, 16
        %s243 = scalar_lea.vmem [#allocation2], %s242
        // Predicated region
        $region33: #{tpu_custom_call.1} parent=31 // pred_check
          %p244 = pneg %p67
        $region34: #{tpu_custom_call.1} parent=31 // pred_check_branch
          %246 = sbr.rel (%p244) target = $region36
        $region35: #{tpu_custom_call.1} parent=31 // pred_region
          %248 = dma.done %s240, 256
        $region36: #{tpu_custom_call.1} parent=31 // pred_fallthru
          _
        %s249 = sand.u32 %s23, 1
        %s250 = scalar_lea.sflag [#allocation6], %s249
        %s251 = sand.u32 %s80, 1
        %s252 = smul.addr %s251, 32
        %s253 = scalar_lea.vmem [#allocation5], %s252
        // Predicated region
        $region37: #{tpu_custom_call.1} parent=31 // pred_check
          %p254 = pneg %p93
        $region38: #{tpu_custom_call.1} parent=31 // pred_check_branch
          %256 = sbr.rel (%p254) target = $region40
        $region39: #{tpu_custom_call.1} parent=31 // pred_region
          %258 = dma.done %s250, 512
        $region40: #{tpu_custom_call.1} parent=31 // pred_fallthru
          _
        %s259 = sand.u32 %s23, 1
        %s260 = scalar_lea.sflag [#allocation6], %s259
        %s261 = sand.u32 %s106, 1
        %s262 = scalar_lea.vmem [#allocation7], %s261
        // Predicated region
        $region41: #{tpu_custom_call.1} parent=31 // pred_check
          %p263 = pneg %p119
        $region42: #{tpu_custom_call.1} parent=31 // pred_check_branch
          %265 = sbr.rel (%p263) target = $region44
        $region43: #{tpu_custom_call.1} parent=31 // pred_region
          %267 = dma.done %s260, 16
        $region44: #{tpu_custom_call.1} parent=31 // pred_fallthru
          _
        %s268 = sand.u32 %s54, 1
        %s269 = scalar_lea.sflag [#allocation3], %s268
        %s270 = sand.u32 %s54, 1
        %s271 = smul.addr %s270, 16
        %s272 = scalar_lea.vmem [#allocation2], %s271
        %p273 = pneg %p67
        %p274 = pneg %p64
        %s275 = sand.u32 %s23, 1
        %s276 = scalar_lea.sflag [#allocation6], %s275
        %s277 = sand.u32 %s80, 1
        %s278 = smul.addr %s277, 32
        %s279 = scalar_lea.vmem [#allocation5], %s278
        %p280 = pneg %p93
        %p281 = pneg %p90
        %s282 = sand.u32 %s23, 1
        %s283 = scalar_lea.sflag [#allocation6], %s282
        %s284 = sand.u32 %s106, 1
        %s285 = scalar_lea.vmem [#allocation7], %s284
        %p286 = pneg %p119
        %p287 = pneg %p116
        %p288 = pneg %p149
        %p289 = pneg %p146
        %s290 = sand.u32 %s136, 1
        %s291 = scalar_lea.sflag [#allocation4], %s290
        %s292 = sand.u32 %s136, 1
        %s293 = smul.addr %s292, 32
        %s294 = scalar_lea.vmem [#allocation8], %s293
        %v295 = vld [vmem:[%s243] sm:$0xff]
        %v296 = vld [vmem:[%s253] sm:$0xff]
        %v297 = vld [vmem:[%s253 + $0x8] sm:$0xff]
        %s298 = scalar_lea.vmem %s243, 8 [#allocation2]
        %v299 = vld [vmem:[%s298] sm:$0xff]
        %v300 = vld [vmem:[%s253 + $0x10] sm:$0xff]
        %v301 = vld [vmem:[%s253 + $0x18] sm:$0xff]
        %vm302 = vcmask 130048
        %v304 = vsel %vm302, %v299, 0
        %306 = vmatpush.msra.mxu0 0.0
        %307 = vmatpush.msra.mxu0 0.0
        %308 = vmatpush.msra.mxu0 0.0
        %309 = vmatpush.msra.mxu0 0.0
        %310 = vmatpush.msra.mxu0 0.0
        %311 = vmatpush.msra.mxu0 0.0
        %312 = vmatpush.msra.mxu0 0.0
        %313 = vmatpush.msra.mxu0 0.0
        %314 = vmatpush.msra.mxu0 0.0
        %315 = vmatpush.msra.mxu0 0.0
        %316 = vmatpush.msra.mxu0 0.0
        %317 = vmatpush.msra.mxu0 0.0
        %318 = vmatpush.msra.mxu0 0.0
        %319 = vmatpush.msra.mxu0 0.0
        %320 = vmatpush.msra.mxu0 %v301
        %321 = vmatpush.msra.mxu0 %v300
        %322 = vmatmul.f32.gmra.mxu0 %v304
        %v323 = vpop.f32.mrf.mxu0
        %v324 = vadd.f32 0.0, %v323
        %325 = vdwg.mxu0
        %v327 = vsel %vm302, %v295, 0
        %329 = vmatpush.msra.mxu0 0.0
        %330 = vmatpush.msra.mxu0 0.0
        %331 = vmatpush.msra.mxu0 0.0
        %332 = vmatpush.msra.mxu0 0.0
        %333 = vmatpush.msra.mxu0 0.0
        %334 = vmatpush.msra.mxu0 0.0
        %335 = vmatpush.msra.mxu0 0.0
        %336 = vmatpush.msra.mxu0 0.0
        %337 = vmatpush.msra.mxu0 0.0
        %338 = vmatpush.msra.mxu0 0.0
        %339 = vmatpush.msra.mxu0 0.0
        %340 = vmatpush.msra.mxu0 0.0
        %341 = vmatpush.msra.mxu0 0.0
        %342 = vmatpush.msra.mxu0 0.0
        %343 = vmatpush.msra.mxu0 %v297
        %344 = vmatpush.msra.mxu0 %v296
        %345 = vmatmul.f32.gmra.mxu0 %v327
        %v346 = vpop.f32.mrf.mxu0
        %v347 = vadd.f32 %v324, %v346
        %348 = vdwg.mxu0
        %v349 = vld [vmem:[%s262] sm:$0x1]
        %v351 = vperm.slane %v349, 0
        %v353 = vadd.f32 %v347, %v351
        %354 = vst.msk [vmem:[%s294] sm:$0xff] %vm302, %v353
        %356 = vrot.lane.b32.xlu0 %v353, 112
        %v357 = vpop.permute.xlu0 %356
        %s359 = scalar_lea.vmem %s294, 8 [#allocation8]
        %360 = vst.msk [vmem:[%s359] sm:$0xff] %vm302, %v357
        %361 = vrot.lane.b32.xlu0 %v353, 96
        %v362 = vpop.permute.xlu0 %361
        %s364 = scalar_lea.vmem %s294, 16 [#allocation8]
        %365 = vst.msk [vmem:[%s364] sm:$0xff] %vm302, %v362
        %366 = vrot.lane.b32.xlu0 %v353, 80
        %v367 = vpop.permute.xlu0 %366
        %s369 = scalar_lea.vmem %s294, 24 [#allocation8]
        %370 = vst.msk [vmem:[%s369] sm:$0xff] %vm302, %v367
        %s371 = sand.u32 %s136, 1
        %s372 = scalar_lea.sflag [#allocation4], %s371
        %s373 = sand.u32 %s136, 1
        %s374 = smul.addr %s373, 32
        %s375 = scalar_lea.vmem [#allocation8], %s374
        // Predicated region
        $region45: #{tpu_custom_call.1} parent=31 // pred_check
          %p376 = pneg %p146
        $region46: #{tpu_custom_call.1} parent=31 // pred_check_branch
          %378 = sbr.rel (%p376) target = $region48
        $region47: #{tpu_custom_call.1} parent=31 // pred_region
          %380 = vsyncadd %s372, 0
          %s381 = smul.addr %s29, 4
          %s382 = sadd.s32 %s30, %s381
          %s383 = smul.addr %s28, 8
          %s384 = sadd.s32 %s382, %s383
          %s385 = smul.addr %s384, 8
          %s386 = scalar_lea.hbm %s3, %s385
          %s387 = sshll.u32 %s375, 4
          %s388 = int_to_ptr.vmem [resolvable:$true] %s387
          %s389 = sshll.u32 %s386, 4
          %s390 = int_to_ptr.hbm [resolvable:$true] %s389
          %395 = dma.vmem_to_hbm [thread:$0]  %s388, 512, %s390, %s372, 128, 128, 8
        $region48: #{tpu_custom_call.1} parent=31 // pred_fallthru
          _
      $region32: #{tpu_custom_call.1} parent=5 // pred_fallthru
        _
      %p396 = scmp.le.s32.totalorder 2, %s18
      // Predicated region
      $region49: #{tpu_custom_call.1} parent=5 // pred_check
        %p397 = pneg %p396
      $region50: #{tpu_custom_call.1} parent=5 // pred_check_branch
        %399 = sbr.rel (%p397) target = $region52
      $region51: #{tpu_custom_call.1} parent=5 // pred_region
        %s400 = ssub.s32 %s18, 2
        // Predicated region
        $region53: #{tpu_custom_call.1} parent=51 // pred_check
          %p401 = pneg %p152
        $region54: #{tpu_custom_call.1} parent=51 // pred_check_branch
          %403 = sbr.rel (%p401) target = $region56
        $region55: #{tpu_custom_call.1} parent=51 // pred_region
          %s404 = sand.u32 %s137, 1
          %s405 = scalar_lea.sflag [#allocation4], %s404
          %s406 = sand.u32 %s137, 1
          %s407 = smul.addr %s406, 32
          %s408 = scalar_lea.vmem [#allocation8], %s407
          %410 = dma.done %s405, 512
        $region56: #{tpu_custom_call.1} parent=51 // pred_fallthru
          _
      $region52: #{tpu_custom_call.1} parent=5 // pred_fallthru
        _
    $region6: #{tpu_custom_call.1} parent=1 // loop_footer
      %s22 = sadd.s32 1, %s18
    $region7: #{tpu_custom_call.1} parent=1 // loop_footer_branch
      %17 = sbr.rel target = $region3
    $region8: #{tpu_custom_call.1} parent=1 // loop_exit
      _
    %411 = vsyncpa [#allocation3], 1
    %s412 = scalar_lea.sflag [#allocation3], 1
    %413 = vsyncpa %s412, 1
    %414 = vsyncpa [#allocation6], 1
    %s415 = scalar_lea.sflag [#allocation6], 1
    %416 = vsyncpa %s415, 1
    %417 = vsyncpa [#allocation4], 1
    %s418 = scalar_lea.sflag [#allocation4], 1
    %419 = vsyncpa %s418, 1

</llo_original>
